<compile_context>
chip_gen: v5e
topology: v5e:2x2
jax: 0.10.0
libtpu: 0.0.40
codegen_flags: <defaults>
</compile_context>

<pallas_src>
import functools

import jax
import jax.numpy as jnp
from jax.experimental import pallas as pl
from jax.experimental.pallas import tpu as pltpu


HIDDEN = 256


def _round_up(x, m):
    return ((x + m - 1) // m) * m


def _has_bf16_valu():
    """v6e / v7x have a bf16 VALU; v5e and older do not."""
    try:
        kind = jax.devices()[0].device_kind.lower()
    except Exception:
        return False
    return not any(v in kind for v in ("v2", "v3", "v4", "v5"))


# Epilogue (bias add + ReLU) dtype: bf16 where the VALU supports it, f32 else.
EPILOGUE_DTYPE = jnp.bfloat16 if _has_bf16_valu() else jnp.float32


def _choose_tiling(B, tb_max=1024):
    """Pick (batch_tile, n_grid_steps).

    * Small batches collapse to a single grid step (per-step pipeline overhead
      would otherwise dominate).
    * Larger batches use an even step count (balances v7x's two TensorCores)
      with the tile derived from B so zero-padding waste is minimal. Tiles are
      16-row aligned (bf16 sublane packing) and capped at tb_max rows.
    """
    b_aligned = _round_up(B, 16)
    if b_aligned <= 256:
        return b_aligned, 1
    n_steps = 2 * max(1, -(-b_aligned // (2 * tb_max)))
    tb = _round_up(-(-b_aligned // n_steps), 16)
    while tb * n_steps < b_aligned:   # guard (should not trigger)
        tb += 16
    return tb, n_steps


def dqn_kernel(x_ref, w1_ref, b1_ref, w2_ref, b2_ref, w3_ref, b3_ref,
               w4_ref, b4_ref, o_ref):
    def linear(h, w_ref, b_ref, relu):
        # bf16 MXU inputs, f32 accumulation; epilogue in the bias dtype
        # (bf16 on v6e/v7x, f32 on v5e and older).
        acc = jnp.dot(h, w_ref[...], preferred_element_type=jnp.float32)
        acc = acc.astype(b_ref.dtype) + b_ref[...]
        if relu:
            acc = jnp.maximum(acc, 0).astype(jnp.bfloat16)
        return acc

    h = linear(x_ref[...], w1_ref, b1_ref, relu=True)
    h = linear(h, w2_ref, b2_ref, relu=True)
    h = linear(h, w3_ref, b3_ref, relu=True)
    out = linear(h, w4_ref, b4_ref, relu=False)
    o_ref[...] = out.astype(o_ref.dtype)


@functools.partial(jax.jit, static_argnames=("tb_max",))
def dqn_forward(x, params, *, tb_max=1024):
    """x: [B, D] float32. Returns [B, A] float32 Q-values.

    params: w1..w4 stored [in, out] bf16; b1..b4 stored [1, out] in
    EPILOGUE_DTYPE.
    """
    B, D = x.shape
    A = params["b4"].shape[1]

    # Pad the action dim to a lane-dense multiple of 128 (unmasked stores).
    A_pad = _round_up(A, 128)
    w4 = jnp.pad(params["w4"], ((0, 0), (0, A_pad - A)))
    b4 = jnp.pad(params["b4"], ((0, 0), (0, A_pad - A)))

    # Batch-adaptive tiling: full blocks only, minimal padding.
    TB, n_steps = _choose_tiling(B, tb_max)
    B_pad = TB * n_steps
    x_p = jnp.pad(x, ((0, B_pad - B), (0, 0))).astype(jnp.bfloat16)

    def batch_spec(cols):
        return pl.BlockSpec((TB, cols), lambda i: (i, 0))

    def resident_spec(arr):
        # Whole-array block, same index every grid step -> stays in VMEM.
        return pl.BlockSpec(arr.shape, lambda i: (0,) * arr.ndim)

    args = (x_p,
            params["w1"], params["b1"],
            params["w2"], params["b2"],
            params["w3"], params["b3"],
            w4, b4)
    in_specs = [batch_spec(D)] + [resident_spec(a) for a in args[1:]]

    flops = 2 * B_pad * (D * HIDDEN + 2 * HIDDEN * HIDDEN + HIDDEN * A_pad)
    bytes_accessed = (
        x_p.size * 2 + B_pad * A_pad * 2                     # bf16 activations
        + sum(a.size * a.dtype.itemsize for a in args[1:])   # weights & biases
    )

    out = pl.pallas_call(
        dqn_kernel,
        out_shape=jax.ShapeDtypeStruct((B_pad, A_pad), jnp.bfloat16),
        grid=(n_steps,),
        in_specs=in_specs,
        out_specs=pl.BlockSpec((TB, A_pad), lambda i: (i, 0)),
        compiler_params=pltpu.CompilerParams(
            dimension_semantics=("parallel",),   # dual-TC sharding on v7x
        ),
        cost_estimate=pl.CostEstimate(
            flops=flops, transcendentals=0, bytes_accessed=bytes_accessed),
    )(*args)

    # Strip batch/lane padding; return f32 Q-values like the PyTorch module.
    return out[:B, :A].astype(jnp.float32)


def init_params(key, input_dim, hidden, num_actions):
    """Deterministic init mimicking torch.nn.Linear (U(-1/sqrt(fan_in), ...)).

    Weights stored [in, out] (transposed vs PyTorch) in bf16; biases [1, out]
    in EPILOGUE_DTYPE.
    """
    dims = [(input_dim, hidden), (hidden, hidden), (hidden, hidden),
            (hidden, num_actions)]
    params = {}
    for i, (fan_in, fan_out) in enumerate(dims, start=1):
        key, kw, kb = jax.random.split(key, 3)
        bound = 1.0 / jnp.sqrt(jnp.float32(fan_in))
        w = jax.random.uniform(kw, (fan_in, fan_out), jnp.float32, -bound, bound)
        b = jax.random.uniform(kb, (1, fan_out), jnp.float32, -bound, bound)
        params[f"w{i}"] = w.astype(jnp.bfloat16)
        params[f"b{i}"] = b.astype(EPILOGUE_DTYPE)
    return params


def dqn_reference(x, params):
    """Pure-JAX reference mirroring the kernel numerics."""
    h = x.astype(jnp.bfloat16)
    for i in range(1, 4):
        acc = jnp.dot(h, params[f"w{i}"], preferred_element_type=jnp.float32)
        acc = acc.astype(params[f"b{i}"].dtype) + params[f"b{i}"]
        h = jnp.maximum(acc, 0).astype(jnp.bfloat16)
    acc = jnp.dot(h, params["w4"], preferred_element_type=jnp.float32)
    acc = acc.astype(params["b4"].dtype) + params["b4"]
    return acc.astype(jnp.bfloat16).astype(jnp.float32)


if __name__ == "__main__":
    key = jax.random.PRNGKey(0)
    k_x, k_x2, k_p = jax.random.split(key, 3)

    BATCH = 2
    INPUT_DIM = 32      # input_shape[0]
    NUM_ACTIONS = 8

    params = init_params(k_p, INPUT_DIM, HIDDEN, NUM_ACTIONS)

    # Small, spec-sized batch: single grid step.
    x = jax.random.normal(k_x, (BATCH, INPUT_DIM), jnp.float32)
    out = dqn_forward(x, params)
    jax.block_until_ready(out)
    ref = dqn_reference(x, params)
    assert out.shape == (BATCH, NUM_ACTIONS)
    assert jnp.allclose(out, ref, atol=2e-2, rtol=2e-2), (
        float(jnp.max(jnp.abs(out - ref))))

    # Replay-style batch: exercises the multi-step, balanced (even) grid.
    x2 = jax.random.normal(k_x2, (300, INPUT_DIM), jnp.float32)
    out2 = dqn_forward(x2, params)
    jax.block_until_ready(out2)
    ref2 = dqn_reference(x2, params)
    assert out2.shape == (300, NUM_ACTIONS)
    assert jnp.allclose(out2, ref2, atol=2e-2, rtol=2e-2), (
        float(jnp.max(jnp.abs(out2 - ref2))))

    print("KERNEL_OK")
</pallas_src>

<mosaic_0001>
module attributes {stable_mosaic.version = 11 : i64} {
  func.func @dqn_kernel(%arg0: i32, %arg1: memref<16x32xbf16, #tpu.memory_space<vmem>>, %arg2: memref<32x256xbf16, #tpu.memory_space<vmem>>, %arg3: memref<1x256xbf16, #tpu.memory_space<vmem>>, %arg4: memref<256x256xbf16, #tpu.memory_space<vmem>>, %arg5: memref<1x256xbf16, #tpu.memory_space<vmem>>, %arg6: memref<256x256xbf16, #tpu.memory_space<vmem>>, %arg7: memref<1x256xbf16, #tpu.memory_space<vmem>>, %arg8: memref<256x128xbf16, #tpu.memory_space<vmem>>, %arg9: memref<1x128xbf16, #tpu.memory_space<vmem>>, %arg10: memref<16x128xbf16, #tpu.memory_space<vmem>>) attributes {dimension_semantics = [#tpu.dimension_semantics<parallel>], iteration_bounds = array<i64: 1>, scalar_prefetch = 0 : i64, scratch_operands = 0 : i64, tpu.core_type = #tpu.core_type<tc>, window_params = [{transform_indices = @transform_0, window_bounds = array<i64: 16, 32>}, {pipeline_mode = #tpu.pipeline_mode<synchronous>, transform_indices = @transform_1, window_bounds = array<i64: 32, 256>}, {pipeline_mode = #tpu.pipeline_mode<synchronous>, transform_indices = @transform_2, window_bounds = array<i64: 1, 256>}, {pipeline_mode = #tpu.pipeline_mode<synchronous>, transform_indices = @transform_3, window_bounds = array<i64: 256, 256>}, {pipeline_mode = #tpu.pipeline_mode<synchronous>, transform_indices = @transform_4, window_bounds = array<i64: 1, 256>}, {pipeline_mode = #tpu.pipeline_mode<synchronous>, transform_indices = @transform_5, window_bounds = array<i64: 256, 256>}, {pipeline_mode = #tpu.pipeline_mode<synchronous>, transform_indices = @transform_6, window_bounds = array<i64: 1, 256>}, {pipeline_mode = #tpu.pipeline_mode<synchronous>, transform_indices = @transform_7, window_bounds = array<i64: 256, 128>}, {pipeline_mode = #tpu.pipeline_mode<synchronous>, transform_indices = @transform_8, window_bounds = array<i64: 1, 128>}, {transform_indices = @transform_9, window_bounds = array<i64: 16, 128>}]} {
    %c0 = arith.constant 0 : index
    %c0_0 = arith.constant 0 : index
    %0 = vector.load %arg1[%c0, %c0_0] : memref<16x32xbf16, #tpu.memory_space<vmem>>, vector<16x32xbf16>
    %c0_1 = arith.constant 0 : index
    %c0_2 = arith.constant 0 : index
    %1 = vector.load %arg2[%c0_1, %c0_2] : memref<32x256xbf16, #tpu.memory_space<vmem>>, vector<32x256xbf16>
    %cst = arith.constant dense<0.000000e+00> : vector<16x256xf32>
    %2 = tpu.matmul %0, %1, %cst {dimension_numbers = #tpu.dot_dimension_numbers<[1], [0], [0], [1], [0, 0, 1, 1], [], []>} : vector<16x32xbf16>, vector<32x256xbf16>, vector<16x256xf32> -> vector<16x256xf32>
    %3 = arith.truncf %2 : vector<16x256xf32> to vector<16x256xbf16>
    %c0_3 = arith.constant 0 : index
    %c0_4 = arith.constant 0 : index
    %4 = vector.load %arg3[%c0_3, %c0_4] : memref<1x256xbf16, #tpu.memory_space<vmem>>, vector<1x256xbf16>
    %5 = vector.broadcast %4 : vector<1x256xbf16> to vector<16x256xbf16>
    %6 = arith.addf %3, %5 : vector<16x256xbf16>
    %cst_5 = arith.constant 0.000000e+00 : bf16
    %7 = vector.broadcast %cst_5 : bf16 to vector<16x256xbf16>
    %8 = arith.maximumf %6, %7 : vector<16x256xbf16>
    %c0_6 = arith.constant 0 : index
    %c0_7 = arith.constant 0 : index
    %9 = vector.load %arg4[%c0_6, %c0_7] : memref<256x256xbf16, #tpu.memory_space<vmem>>, vector<256x256xbf16>
    %cst_8 = arith.constant dense<0.000000e+00> : vector<16x256xf32>
    %10 = tpu.matmul %8, %9, %cst_8 {dimension_numbers = #tpu.dot_dimension_numbers<[1], [0], [0], [1], [0, 0, 1, 1], [], []>} : vector<16x256xbf16>, vector<256x256xbf16>, vector<16x256xf32> -> vector<16x256xf32>
    %11 = arith.truncf %10 : vector<16x256xf32> to vector<16x256xbf16>
    %c0_9 = arith.constant 0 : index
    %c0_10 = arith.constant 0 : index
    %12 = vector.load %arg5[%c0_9, %c0_10] : memref<1x256xbf16, #tpu.memory_space<vmem>>, vector<1x256xbf16>
    %13 = vector.broadcast %12 : vector<1x256xbf16> to vector<16x256xbf16>
    %14 = arith.addf %11, %13 : vector<16x256xbf16>
    %cst_11 = arith.constant 0.000000e+00 : bf16
    %15 = vector.broadcast %cst_11 : bf16 to vector<16x256xbf16>
    %16 = arith.maximumf %14, %15 : vector<16x256xbf16>
    %c0_12 = arith.constant 0 : index
    %c0_13 = arith.constant 0 : index
    %17 = vector.load %arg6[%c0_12, %c0_13] : memref<256x256xbf16, #tpu.memory_space<vmem>>, vector<256x256xbf16>
    %cst_14 = arith.constant dense<0.000000e+00> : vector<16x256xf32>
    %18 = tpu.matmul %16, %17, %cst_14 {dimension_numbers = #tpu.dot_dimension_numbers<[1], [0], [0], [1], [0, 0, 1, 1], [], []>} : vector<16x256xbf16>, vector<256x256xbf16>, vector<16x256xf32> -> vector<16x256xf32>
    %19 = arith.truncf %18 : vector<16x256xf32> to vector<16x256xbf16>
    %c0_15 = arith.constant 0 : index
    %c0_16 = arith.constant 0 : index
    %20 = vector.load %arg7[%c0_15, %c0_16] : memref<1x256xbf16, #tpu.memory_space<vmem>>, vector<1x256xbf16>
    %21 = vector.broadcast %20 : vector<1x256xbf16> to vector<16x256xbf16>
    %22 = arith.addf %19, %21 : vector<16x256xbf16>
    %cst_17 = arith.constant 0.000000e+00 : bf16
    %23 = vector.broadcast %cst_17 : bf16 to vector<16x256xbf16>
    %24 = arith.maximumf %22, %23 : vector<16x256xbf16>
    %c0_18 = arith.constant 0 : index
    %c0_19 = arith.constant 0 : index
    %25 = vector.load %arg8[%c0_18, %c0_19] : memref<256x128xbf16, #tpu.memory_space<vmem>>, vector<256x128xbf16>
    %cst_20 = arith.constant dense<0.000000e+00> : vector<16x128xf32>
    %26 = tpu.matmul %24, %25, %cst_20 {dimension_numbers = #tpu.dot_dimension_numbers<[1], [0], [0], [1], [0, 0, 1, 1], [], []>} : vector<16x256xbf16>, vector<256x128xbf16>, vector<16x128xf32> -> vector<16x128xf32>
    %27 = arith.truncf %26 : vector<16x128xf32> to vector<16x128xbf16>
    %c0_21 = arith.constant 0 : index
    %c0_22 = arith.constant 0 : index
    %28 = vector.load %arg9[%c0_21, %c0_22] : memref<1x128xbf16, #tpu.memory_space<vmem>>, vector<1x128xbf16>
    %29 = vector.broadcast %28 : vector<1x128xbf16> to vector<16x128xbf16>
    %30 = arith.addf %27, %29 : vector<16x128xbf16>
    %c0_23 = arith.constant 0 : index
    %c0_24 = arith.constant 0 : index
    %31 = vector.load %arg10[%c0_23, %c0_24] : memref<16x128xbf16, #tpu.memory_space<vmem>>, vector<16x128xbf16>
    tpu.vector_store %arg10[%c0_23, %c0_24], %30 {strides = array<i32>} : memref<16x128xbf16, #tpu.memory_space<vmem>>, vector<16x128xbf16>,
    return
  }
  func.func @transform_0(%arg0: i32) -> (i32, i32) {
    %c0_i32 = arith.constant 0 : i32
    %c0_i32_0 = arith.constant 0 : i32
    return %arg0, %c0_i32 : i32, i32
  }
  func.func @transform_1(%arg0: i32) -> (i32, i32) {
    %c0_i32 = arith.constant 0 : i32
    %c0_i32_0 = arith.constant 0 : i32
    %c0_i32_1 = arith.constant 0 : i32
    return %c0_i32, %c0_i32_0 : i32, i32
  }
  func.func @transform_2(%arg0: i32) -> (i32, i32) {
    %c0_i32 = arith.constant 0 : i32
    %c0_i32_0 = arith.constant 0 : i32
    %c0_i32_1 = arith.constant 0 : i32
    return %c0_i32, %c0_i32_0 : i32, i32
  }
  func.func @transform_3(%arg0: i32) -> (i32, i32) {
    %c0_i32 = arith.constant 0 : i32
    %c0_i32_0 = arith.constant 0 : i32
    %c0_i32_1 = arith.constant 0 : i32
    return %c0_i32, %c0_i32_0 : i32, i32
  }
  func.func @transform_4(%arg0: i32) -> (i32, i32) {
    %c0_i32 = arith.constant 0 : i32
    %c0_i32_0 = arith.constant 0 : i32
    %c0_i32_1 = arith.constant 0 : i32
    return %c0_i32, %c0_i32_0 : i32, i32
  }
  func.func @transform_5(%arg0: i32) -> (i32, i32) {
    %c0_i32 = arith.constant 0 : i32
    %c0_i32_0 = arith.constant 0 : i32
    %c0_i32_1 = arith.constant 0 : i32
    return %c0_i32, %c0_i32_0 : i32, i32
  }
  func.func @transform_6(%arg0: i32) -> (i32, i32) {
    %c0_i32 = arith.constant 0 : i32
    %c0_i32_0 = arith.constant 0 : i32
    %c0_i32_1 = arith.constant 0 : i32
    return %c0_i32, %c0_i32_0 : i32, i32
  }
  func.func @transform_7(%arg0: i32) -> (i32, i32) {
    %c0_i32 = arith.constant 0 : i32
    %c0_i32_0 = arith.constant 0 : i32
    %c0_i32_1 = arith.constant 0 : i32
    return %c0_i32, %c0_i32_0 : i32, i32
  }
  func.func @transform_8(%arg0: i32) -> (i32, i32) {
    %c0_i32 = arith.constant 0 : i32
    %c0_i32_0 = arith.constant 0 : i32
    %c0_i32_1 = arith.constant 0 : i32
    return %c0_i32, %c0_i32_0 : i32, i32
  }
  func.func @transform_9(%arg0: i32) -> (i32, i32) {
    %c0_i32 = arith.constant 0 : i32
    %c0_i32_0 = arith.constant 0 : i32
    return %arg0, %c0_i32 : i32, i32
  }
}

</mosaic_0001>

<llo_original>
// kernel: dqn_forward.1
$region0: #{dqn_forward.1}
  #allocation0 [shape = 'u32[]', space=smem, size = 0x4, offset = 0x4, fixed_abs, tag = 'smem constant byte address 0x4 - core index']
  #allocation1 [shape = 'u32[72,128]{1,0:T(1,128)}', space=vmem, size = 0x9000, scoped, tag = 'internal scratch']
  %s0 = inlined_call_operand.vmem [shape: bf16[16,32], index: 0, kind: input, shape index: {}]
  %s1 = inlined_call_operand.vmem [shape: bf16[32,256], index: 1, kind: input, shape index: {}]
  %s2 = inlined_call_operand.vmem [shape: bf16[1,256], index: 2, kind: input, shape index: {}]
  %s3 = inlined_call_operand.vmem [shape: bf16[256,256], index: 3, kind: input, shape index: {}]
  %s4 = inlined_call_operand.vmem [shape: bf16[1,256], index: 4, kind: input, shape index: {}]
  %s5 = inlined_call_operand.hbm [shape: bf16[256,256], index: 5, kind: input, shape index: {}]
  %s6 = inlined_call_operand.vmem [shape: bf16[1,256], index: 6, kind: input, shape index: {}]
  %s7 = inlined_call_operand.vmem [shape: bf16[256,128], index: 7, kind: input, shape index: {}]
  %s8 = inlined_call_operand.vmem [shape: bf16[1,128], index: 8, kind: input, shape index: {}]
  %s9 = inlined_call_operand.vmem [shape: bf16[16,128], index: 9, kind: output, shape index: {}]
  %s10 = sld [smem:[#allocation0]]
  $region50: #{dqn_forward.1} parent=0
    _
  %s12 = ssub.s32 1, %s10
  %s13 = scalar_select 0, %s12, %s10
  $region1: #{dqn_forward.1} parent=0
    #allocation2 [shape = 'u8[131072]{0}', space=vmem, size = 0x20000, scoped, tag = 'input window, operand 5, single buffered']
    #allocation3 [shape = 's32[1]{0}', space=sflag, size = 0x4, scoped, tag = 'scoped memory for dqn_forward.1']
    %14 = vsyncpa [#allocation3], 0
    // Predicated region
    $region2: #{dqn_forward.1} parent=1 // pred_check
      _
    $region3: #{dqn_forward.1} parent=1 // pred_check_branch
      %16 = sbr.rel (0) target = $region5
    $region4: #{dqn_forward.1} parent=1 // pred_region
      _
    $region5: #{dqn_forward.1} parent=1 // pred_fallthru
      _
    // Predicated region
    $region6: #{dqn_forward.1} parent=1 // pred_check
      _
    $region7: #{dqn_forward.1} parent=1 // pred_check_branch
      %18 = sbr.rel (0) target = $region9
    $region8: #{dqn_forward.1} parent=1 // pred_region
      _
    $region9: #{dqn_forward.1} parent=1 // pred_fallthru
      _
    // Predicated region
    $region10: #{dqn_forward.1} parent=1 // pred_check
      _
    $region11: #{dqn_forward.1} parent=1 // pred_check_branch
      %20 = sbr.rel (0) target = $region13
    $region12: #{dqn_forward.1} parent=1 // pred_region
      _
    $region13: #{dqn_forward.1} parent=1 // pred_fallthru
      _
    // Predicated region
    $region14: #{dqn_forward.1} parent=1 // pred_check
      _
    $region15: #{dqn_forward.1} parent=1 // pred_check_branch
      %22 = sbr.rel (0) target = $region17
    $region16: #{dqn_forward.1} parent=1 // pred_region
      _
    $region17: #{dqn_forward.1} parent=1 // pred_fallthru
      _
    // Predicated region
    $region18: #{dqn_forward.1} parent=1 // pred_check
      _
    $region19: #{dqn_forward.1} parent=1 // pred_check_branch
      %24 = sbr.rel (0) target = $region21
    $region20: #{dqn_forward.1} parent=1 // pred_region
      _
    $region21: #{dqn_forward.1} parent=1 // pred_fallthru
      _
    // Predicated region
    $region22: #{dqn_forward.1} parent=1 // pred_check
      _
    $region23: #{dqn_forward.1} parent=1 // pred_check_branch
      %26 = sbr.rel (0) target = $region25
    $region24: #{dqn_forward.1} parent=1 // pred_region
      %28 = vsyncadd [#allocation3], 0
      %s29 = sshll.u32 %s5, 4
      %s30 = int_to_ptr.hbm [resolvable:$true] %s29
      %s31 = sshll.u32 [#allocation2], 4
      %s32 = int_to_ptr.vmem [resolvable:$true] %s31
      %37 = dma.hbm_to_vmem [thread:$0]  %s30, 4096, %s32, [#allocation3], 128, 128, 8
    $region25: #{dqn_forward.1} parent=1 // pred_fallthru
      _
    // Predicated region
    $region26: #{dqn_forward.1} parent=1 // pred_check
      _
    $region27: #{dqn_forward.1} parent=1 // pred_check_branch
      %39 = sbr.rel (0) target = $region29
    $region28: #{dqn_forward.1} parent=1 // pred_region
      _
    $region29: #{dqn_forward.1} parent=1 // pred_fallthru
      _
    // Predicated region
    $region30: #{dqn_forward.1} parent=1 // pred_check
      _
    $region31: #{dqn_forward.1} parent=1 // pred_check_branch
      %41 = sbr.rel (0) target = $region33
    $region32: #{dqn_forward.1} parent=1 // pred_region
      _
    $region33: #{dqn_forward.1} parent=1 // pred_fallthru
      _
    // Predicated region
    $region34: #{dqn_forward.1} parent=1 // pred_check
      _
    $region35: #{dqn_forward.1} parent=1 // pred_check_branch
      %43 = sbr.rel (0) target = $region37
    $region36: #{dqn_forward.1} parent=1 // pred_region
      _
    $region37: #{dqn_forward.1} parent=1 // pred_fallthru
      _
    // Predicated region
    $region38: #{dqn_forward.1} parent=1 // pred_check
      _
    $region39: #{dqn_forward.1} parent=1 // pred_check_branch
      %45 = sbr.rel (0) target = $region41
    $region40: #{dqn_forward.1} parent=1 // pred_region
      %47 = dma.done [#allocation3], 4096
    $region41: #{dqn_forward.1} parent=1 // pred_fallthru
      _
    %v49 = vld [vmem:[%s0] sm:$0xf]
    %v50 = vld [vmem:[%s0 + $0x4] sm:$0xf]
    %v51 = vld [vmem:[%s1] sm:$0xff]
    %v52 = vld [vmem:[%s1 + $0x8] sm:$0xff]
    %v53 = vld [vmem:[%s1 + $0x10] sm:$0xff]
    %v54 = vld [vmem:[%s1 + $0x18] sm:$0xff]
    %v57 = vunpack.c.l.b16 %v49
    %v58 = vunpack.c.l.b16 %v50
    %v59 = vpack.c.b16 %v58, %v57
    %v64 = vunpack.c.l.b16 %v51
    %v65 = vunpack.c.h.b16 %v51
    %v66 = vunpack.c.l.b16 %v52
    %v67 = vunpack.c.h.b16 %v52
    %v68 = vunpack.c.l.b16 %v53
    %v69 = vunpack.c.h.b16 %v53
    %v70 = vunpack.c.l.b16 %v54
    %v71 = vunpack.c.h.b16 %v54
    %v72 = vpack.c.b16 %v66, %v64
    %v73 = vpack.c.b16 %v67, %v65
    %v74 = vpack.c.b16 %v70, %v68
    %v75 = vpack.c.b16 %v71, %v69
    %vm80 = vcmask 261120
    %v82 = vsel %vm80, %v59, 0
    %84 = vmatpush.bf16.msra.mxu0 0
    %85 = vmatpush.bf16.msra.mxu0 0
    %86 = vmatpush.bf16.msra.mxu0 0
    %87 = vmatpush.bf16.msra.mxu0 0
    %88 = vmatpush.bf16.msra.mxu0 0
    %89 = vmatpush.bf16.msra.mxu0 0
    %90 = vmatpush.bf16.msra.mxu0 %v74
    %91 = vmatpush.bf16.msra.mxu0 %v72
    %92 = vmatmul.bf16.gmra.mxu0 %v82
    %v93 = vpop.f32.mrf.mxu0
    %v94 = vadd.f32 0.0, %v93
    %v95 = vpop.f32.mrf.mxu0
    %v96 = vadd.f32 0.0, %v95
    %97 = vdwg.mxu0
    %98 = vmatpush.bf16.msra.mxu0 0
    %99 = vmatpush.bf16.msra.mxu0 0
    %100 = vmatpush.bf16.msra.mxu0 0
    %101 = vmatpush.bf16.msra.mxu0 0
    %102 = vmatpush.bf16.msra.mxu0 0
    %103 = vmatpush.bf16.msra.mxu0 0
    %104 = vmatpush.bf16.msra.mxu0 %v75
    %105 = vmatpush.bf16.msra.mxu0 %v73
    %106 = vmatmul.bf16.gmra.mxu0 %v82
    %v107 = vpop.f32.mrf.mxu0
    %v108 = vadd.f32 0.0, %v107
    %v109 = vpop.f32.mrf.mxu0
    %v110 = vadd.f32 0.0, %v109
    %111 = vdwg.mxu0
    %v112 = vpack.c.bf16 %v108, %v94
    %v113 = vpack.c.bf16 %v110, %v96
    %v114 = vld [vmem:[%s2] sm:$0x3]
    %116 = vst [vmem:[#allocation1] ss:$9 sm:$0xff] %v114
    %v117 = vld [vmem:[#allocation1] sm:$0xff]
    %v118 = vld [vmem:[#allocation1 + $0x9] sm:$0xff]
    %v119 = vpack.i.b16 %v117, %v117
    %v121 = vperm.slane %v119, 0
    %v122 = vpack.i.b16 %v118, %v118
    %v124 = vperm.slane %v122, 0
    %v125 = vunpack.c.l.bf16 %v112
    %v126 = vunpack.c.h.bf16 %v112
    %v127 = vunpack.c.l.bf16 %v113
    %v128 = vunpack.c.h.bf16 %v113
    %v129 = vunpack.c.l.bf16 %v121
    %v130 = vunpack.c.l.bf16 %v124
    %v131 = vadd.f32 %v125, %v129
    %v132 = vadd.f32 %v126, %v130
    %v133 = vadd.f32 %v127, %v129
    %v134 = vadd.f32 %v128, %v130
    %v135 = vpack.c.bf16 %v132, %v131
    %v136 = vpack.c.bf16 %v134, %v133
    %v137 = vunpack.c.l.bf16 %v135
    %v138 = vunpack.c.h.bf16 %v135
    %v139 = vunpack.c.l.bf16 %v136
    %v140 = vunpack.c.h.bf16 %v136
    %v141 = vmax.f32 %v137, 0.0
    %v142 = vmax.f32 %v138, 0.0
    %v143 = vmax.f32 %v139, 0.0
    %v144 = vmax.f32 %v140, 0.0
    %v145 = vpack.c.bf16 %v143, %v141
    %v146 = vpack.c.bf16 %v144, %v142
    %v147 = vld [vmem:[%s3] sm:$0xff]
    %v148 = vld [vmem:[%s3 + $0x8] sm:$0xff]
    %v149 = vld [vmem:[%s3 + $0x10] sm:$0xff]
    %v150 = vld [vmem:[%s3 + $0x18] sm:$0xff]
    %v151 = vld [vmem:[%s3 + $0x20] sm:$0xff]
    %v152 = vld [vmem:[%s3 + $0x28] sm:$0xff]
    %v153 = vld [vmem:[%s3 + $0x30] sm:$0xff]
    %v154 = vld [vmem:[%s3 + $0x38] sm:$0xff]
    %v155 = vld [vmem:[%s3 + $0x40] sm:$0xff]
    %v156 = vld [vmem:[%s3 + $0x48] sm:$0xff]
    %v157 = vld [vmem:[%s3 + $0x50] sm:$0xff]
    %v158 = vld [vmem:[%s3 + $0x58] sm:$0xff]
    %v159 = vld [vmem:[%s3 + $0x60] sm:$0xff]
    %v160 = vld [vmem:[%s3 + $0x68] sm:$0xff]
    %v161 = vld [vmem:[%s3 + $0x70] sm:$0xff]
    %v162 = vld [vmem:[%s3 + $0x78] sm:$0xff]
    %v163 = vld [vmem:[%s3 + $0x80] sm:$0xff]
    %v164 = vld [vmem:[%s3 + $0x88] sm:$0xff]
    %v165 = vld [vmem:[%s3 + $0x90] sm:$0xff]
    %v166 = vld [vmem:[%s3 + $0x98] sm:$0xff]
    %v167 = vld [vmem:[%s3 + $0xa0] sm:$0xff]
    %v168 = vld [vmem:[%s3 + $0xa8] sm:$0xff]
    %v169 = vld [vmem:[%s3 + $0xb0] sm:$0xff]
    %v170 = vld [vmem:[%s3 + $0xb8] sm:$0xff]
    %v171 = vld [vmem:[%s3 + $0xc0] sm:$0xff]
    %v172 = vld [vmem:[%s3 + $0xc8] sm:$0xff]
    %v173 = vld [vmem:[%s3 + $0xd0] sm:$0xff]
    %v174 = vld [vmem:[%s3 + $0xd8] sm:$0xff]
    %v175 = vld [vmem:[%s3 + $0xe0] sm:$0xff]
    %v176 = vld [vmem:[%s3 + $0xe8] sm:$0xff]
    %v177 = vld [vmem:[%s3 + $0xf0] sm:$0xff]
    %v178 = vld [vmem:[%s3 + $0xf8] sm:$0xff]
    %v211 = vunpack.c.l.b16 %v147
    %v212 = vunpack.c.h.b16 %v147
    %v213 = vunpack.c.l.b16 %v148
    %v214 = vunpack.c.h.b16 %v148
    %v215 = vunpack.c.l.b16 %v149
    %v216 = vunpack.c.h.b16 %v149
    %v217 = vunpack.c.l.b16 %v150
    %v218 = vunpack.c.h.b16 %v150
    %v219 = vunpack.c.l.b16 %v151
    %v220 = vunpack.c.h.b16 %v151
    %v221 = vunpack.c.l.b16 %v152
    %v222 = vunpack.c.h.b16 %v152
    %v223 = vunpack.c.l.b16 %v153
    %v224 = vunpack.c.h.b16 %v153
    %v225 = vunpack.c.l.b16 %v154
    %v226 = vunpack.c.h.b16 %v154
    %v227 = vunpack.c.l.b16 %v155
    %v228 = vunpack.c.h.b16 %v155
    %v229 = vunpack.c.l.b16 %v156
    %v230 = vunpack.c.h.b16 %v156
    %v231 = vunpack.c.l.b16 %v157
    %v232 = vunpack.c.h.b16 %v157
    %v233 = vunpack.c.l.b16 %v158
    %v234 = vunpack.c.h.b16 %v158
    %v235 = vunpack.c.l.b16 %v159
    %v236 = vunpack.c.h.b16 %v159
    %v237 = vunpack.c.l.b16 %v160
    %v238 = vunpack.c.h.b16 %v160
    %v239 = vunpack.c.l.b16 %v161
    %v240 = vunpack.c.h.b16 %v161
    %v241 = vunpack.c.l.b16 %v162
    %v242 = vunpack.c.h.b16 %v162
    %v243 = vunpack.c.l.b16 %v163
    %v244 = vunpack.c.h.b16 %v163
    %v245 = vunpack.c.l.b16 %v164
    %v246 = vunpack.c.h.b16 %v164
    %v247 = vunpack.c.l.b16 %v165
    %v248 = vunpack.c.h.b16 %v165
    %v249 = vunpack.c.l.b16 %v166
    %v250 = vunpack.c.h.b16 %v166
    %v251 = vunpack.c.l.b16 %v167
    %v252 = vunpack.c.h.b16 %v167
    %v253 = vunpack.c.l.b16 %v168
    %v254 = vunpack.c.h.b16 %v168
    %v255 = vunpack.c.l.b16 %v169
    %v256 = vunpack.c.h.b16 %v169
    %v257 = vunpack.c.l.b16 %v170
    %v258 = vunpack.c.h.b16 %v170
    %v259 = vunpack.c.l.b16 %v171
    %v260 = vunpack.c.h.b16 %v171
    %v261 = vunpack.c.l.b16 %v172
    %v262 = vunpack.c.h.b16 %v172
    %v263 = vunpack.c.l.b16 %v173
    %v264 = vunpack.c.h.b16 %v173
    %v265 = vunpack.c.l.b16 %v174
    %v266 = vunpack.c.h.b16 %v174
    %v267 = vunpack.c.l.b16 %v175
    %v268 = vunpack.c.h.b16 %v175
    %v269 = vunpack.c.l.b16 %v176
    %v270 = vunpack.c.h.b16 %v176
    %v271 = vunpack.c.l.b16 %v177
    %v272 = vunpack.c.h.b16 %v177
    %v273 = vunpack.c.l.b16 %v178
    %v274 = vunpack.c.h.b16 %v178
    %v275 = vpack.c.b16 %v213, %v211
    %v276 = vpack.c.b16 %v214, %v212
    %v277 = vpack.c.b16 %v217, %v215
    %v278 = vpack.c.b16 %v218, %v216
    %v279 = vpack.c.b16 %v221, %v219
    %v280 = vpack.c.b16 %v222, %v220
    %v281 = vpack.c.b16 %v225, %v223
    %v282 = vpack.c.b16 %v226, %v224
    %v283 = vpack.c.b16 %v229, %v227
    %v284 = vpack.c.b16 %v230, %v228
    %v285 = vpack.c.b16 %v233, %v231
    %v286 = vpack.c.b16 %v234, %v232
    %v287 = vpack.c.b16 %v237, %v235
    %v288 = vpack.c.b16 %v238, %v236
    %v289 = vpack.c.b16 %v241, %v239
    %v290 = vpack.c.b16 %v242, %v240
    %v291 = vpack.c.b16 %v245, %v243
    %v292 = vpack.c.b16 %v246, %v244
    %v293 = vpack.c.b16 %v249, %v247
    %v294 = vpack.c.b16 %v250, %v248
    %v295 = vpack.c.b16 %v253, %v251
    %v296 = vpack.c.b16 %v254, %v252
    %v297 = vpack.c.b16 %v257, %v255
    %v298 = vpack.c.b16 %v258, %v256
    %v299 = vpack.c.b16 %v261, %v259
    %v300 = vpack.c.b16 %v262, %v260
    %v301 = vpack.c.b16 %v265, %v263
    %v302 = vpack.c.b16 %v266, %v264
    %v303 = vpack.c.b16 %v269, %v267
    %v304 = vpack.c.b16 %v270, %v268
    %v305 = vpack.c.b16 %v273, %v271
    %v306 = vpack.c.b16 %v274, %v272
    %339 = vmatpush.bf16.msra.mxu0 %v289
    %340 = vmatpush.bf16.msra.mxu0 %v287
    %341 = vmatpush.bf16.msra.mxu0 %v285
    %342 = vmatpush.bf16.msra.mxu0 %v283
    %343 = vmatpush.bf16.msra.mxu0 %v281
    %344 = vmatpush.bf16.msra.mxu0 %v279
    %345 = vmatpush.bf16.msra.mxu0 %v277
    %346 = vmatpush.bf16.msra.mxu0 %v275
    %347 = vmatmul.bf16.gmra.mxu0 %v145
    %v348 = vpop.f32.mrf.mxu0
    %v349 = vadd.f32 0.0, %v348
    %v350 = vpop.f32.mrf.mxu0
    %v351 = vadd.f32 0.0, %v350
    %352 = vdwg.mxu0
    %353 = vmatpush.bf16.msra.mxu0 %v305
    %354 = vmatpush.bf16.msra.mxu0 %v303
    %355 = vmatpush.bf16.msra.mxu0 %v301
    %356 = vmatpush.bf16.msra.mxu0 %v299
    %357 = vmatpush.bf16.msra.mxu0 %v297
    %358 = vmatpush.bf16.msra.mxu0 %v295
    %359 = vmatpush.bf16.msra.mxu0 %v293
    %360 = vmatpush.bf16.msra.mxu0 %v291
    %361 = vmatmul.bf16.gmra.mxu0 %v146
    %v362 = vpop.f32.mrf.mxu0
    %v363 = vadd.f32 %v349, %v362
    %v364 = vpop.f32.mrf.mxu0
    %v365 = vadd.f32 %v351, %v364
    %366 = vdwg.mxu0
    %367 = vmatpush.bf16.msra.mxu0 %v290
    %368 = vmatpush.bf16.msra.mxu0 %v288
    %369 = vmatpush.bf16.msra.mxu0 %v286
    %370 = vmatpush.bf16.msra.mxu0 %v284
    %371 = vmatpush.bf16.msra.mxu0 %v282
    %372 = vmatpush.bf16.msra.mxu0 %v280
    %373 = vmatpush.bf16.msra.mxu0 %v278
    %374 = vmatpush.bf16.msra.mxu0 %v276
    %375 = vmatmul.bf16.gmra.mxu0 %v145
    %v376 = vpop.f32.mrf.mxu0
    %v377 = vadd.f32 0.0, %v376
    %v378 = vpop.f32.mrf.mxu0
    %v379 = vadd.f32 0.0, %v378
    %380 = vdwg.mxu0
    %381 = vmatpush.bf16.msra.mxu0 %v306
    %382 = vmatpush.bf16.msra.mxu0 %v304
    %383 = vmatpush.bf16.msra.mxu0 %v302
    %384 = vmatpush.bf16.msra.mxu0 %v300
    %385 = vmatpush.bf16.msra.mxu0 %v298
    %386 = vmatpush.bf16.msra.mxu0 %v296
    %387 = vmatpush.bf16.msra.mxu0 %v294
    %388 = vmatpush.bf16.msra.mxu0 %v292
    %389 = vmatmul.bf16.gmra.mxu0 %v146
    %v390 = vpop.f32.mrf.mxu0
    %v391 = vadd.f32 %v377, %v390
    %v392 = vpop.f32.mrf.mxu0
    %v393 = vadd.f32 %v379, %v392
    %394 = vdwg.mxu0
    %v395 = vpack.c.bf16 %v391, %v363
    %v396 = vpack.c.bf16 %v393, %v365
    %v397 = vld [vmem:[%s4] sm:$0x3]
    %399 = vst [vmem:[#allocation1] ss:$9 sm:$0xff] %v397
    %v400 = vld [vmem:[#allocation1] sm:$0xff]
    %v401 = vld [vmem:[#allocation1 + $0x9] sm:$0xff]
    %v402 = vpack.i.b16 %v400, %v400
    %v404 = vperm.slane %v402, 0
    %v405 = vpack.i.b16 %v401, %v401
    %v407 = vperm.slane %v405, 0
    %v408 = vunpack.c.l.bf16 %v395
    %v409 = vunpack.c.h.bf16 %v395
    %v410 = vunpack.c.l.bf16 %v396
    %v411 = vunpack.c.h.bf16 %v396
    %v412 = vunpack.c.l.bf16 %v404
    %v413 = vunpack.c.l.bf16 %v407
    %v414 = vadd.f32 %v408, %v412
    %v415 = vadd.f32 %v409, %v413
    %v416 = vadd.f32 %v410, %v412
    %v417 = vadd.f32 %v411, %v413
    %v418 = vpack.c.bf16 %v415, %v414
    %v419 = vpack.c.bf16 %v417, %v416
    %v420 = vunpack.c.l.bf16 %v418
    %v421 = vunpack.c.h.bf16 %v418
    %v422 = vunpack.c.l.bf16 %v419
    %v423 = vunpack.c.h.bf16 %v419
    %v424 = vmax.f32 %v420, 0.0
    %v425 = vmax.f32 %v421, 0.0
    %v426 = vmax.f32 %v422, 0.0
    %v427 = vmax.f32 %v423, 0.0
    %v428 = vpack.c.bf16 %v426, %v424
    %v429 = vpack.c.bf16 %v427, %v425
    %v430 = vld [vmem:[#allocation2] sm:$0xff]
    %v431 = vld [vmem:[#allocation2 + $0x8] sm:$0xff]
    %v432 = vld [vmem:[#allocation2 + $0x10] sm:$0xff]
    %v433 = vld [vmem:[#allocation2 + $0x18] sm:$0xff]
    %v434 = vld [vmem:[#allocation2 + $0x20] sm:$0xff]
    %v435 = vld [vmem:[#allocation2 + $0x28] sm:$0xff]
    %v436 = vld [vmem:[#allocation2 + $0x30] sm:$0xff]
    %v437 = vld [vmem:[#allocation2 + $0x38] sm:$0xff]
    %v438 = vld [vmem:[#allocation2 + $0x40] sm:$0xff]
    %v439 = vld [vmem:[#allocation2 + $0x48] sm:$0xff]
    %v440 = vld [vmem:[#allocation2 + $0x50] sm:$0xff]
    %v441 = vld [vmem:[#allocation2 + $0x58] sm:$0xff]
    %v442 = vld [vmem:[#allocation2 + $0x60] sm:$0xff]
    %v443 = vld [vmem:[#allocation2 + $0x68] sm:$0xff]
    %v444 = vld [vmem:[#allocation2 + $0x70] sm:$0xff]
    %v445 = vld [vmem:[#allocation2 + $0x78] sm:$0xff]
    %v446 = vld [vmem:[#allocation2 + $0x80] sm:$0xff]
    %v447 = vld [vmem:[#allocation2 + $0x88] sm:$0xff]
    %v448 = vld [vmem:[#allocation2 + $0x90] sm:$0xff]
    %v449 = vld [vmem:[#allocation2 + $0x98] sm:$0xff]
    %v450 = vld [vmem:[#allocation2 + $0xa0] sm:$0xff]
    %v451 = vld [vmem:[#allocation2 + $0xa8] sm:$0xff]
    %v452 = vld [vmem:[#allocation2 + $0xb0] sm:$0xff]
    %v453 = vld [vmem:[#allocation2 + $0xb8] sm:$0xff]
    %v454 = vld [vmem:[#allocation2 + $0xc0] sm:$0xff]
    %v455 = vld [vmem:[#allocation2 + $0xc8] sm:$0xff]
    %v456 = vld [vmem:[#allocation2 + $0xd0] sm:$0xff]
    %v457 = vld [vmem:[#allocation2 + $0xd8] sm:$0xff]
    %v458 = vld [vmem:[#allocation2 + $0xe0] sm:$0xff]
    %v459 = vld [vmem:[#allocation2 + $0xe8] sm:$0xff]
    %v460 = vld [vmem:[#allocation2 + $0xf0] sm:$0xff]
    %v461 = vld [vmem:[#allocation2 + $0xf8] sm:$0xff]
    %v494 = vunpack.c.l.b16 %v430
    %v495 = vunpack.c.h.b16 %v430
    %v496 = vunpack.c.l.b16 %v431
    %v497 = vunpack.c.h.b16 %v431
    %v498 = vunpack.c.l.b16 %v432
    %v499 = vunpack.c.h.b16 %v432
    %v500 = vunpack.c.l.b16 %v433
    %v501 = vunpack.c.h.b16 %v433
    %v502 = vunpack.c.l.b16 %v434
    %v503 = vunpack.c.h.b16 %v434
    %v504 = vunpack.c.l.b16 %v435
    %v505 = vunpack.c.h.b16 %v435
    %v506 = vunpack.c.l.b16 %v436
    %v507 = vunpack.c.h.b16 %v436
    %v508 = vunpack.c.l.b16 %v437
    %v509 = vunpack.c.h.b16 %v437
    %v510 = vunpack.c.l.b16 %v438
    %v511 = vunpack.c.h.b16 %v438
    %v512 = vunpack.c.l.b16 %v439
    %v513 = vunpack.c.h.b16 %v439
    %v514 = vunpack.c.l.b16 %v440
    %v515 = vunpack.c.h.b16 %v440
    %v516 = vunpack.c.l.b16 %v441
    %v517 = vunpack.c.h.b16 %v441
    %v518 = vunpack.c.l.b16 %v442
    %v519 = vunpack.c.h.b16 %v442
    %v520 = vunpack.c.l.b16 %v443
    %v521 = vunpack.c.h.b16 %v443
    %v522 = vunpack.c.l.b16 %v444
    %v523 = vunpack.c.h.b16 %v444
    %v524 = vunpack.c.l.b16 %v445
    %v525 = vunpack.c.h.b16 %v445
    %v526 = vunpack.c.l.b16 %v446
    %v527 = vunpack.c.h.b16 %v446
    %v528 = vunpack.c.l.b16 %v447
    %v529 = vunpack.c.h.b16 %v447
    %v530 = vunpack.c.l.b16 %v448
    %v531 = vunpack.c.h.b16 %v448
    %v532 = vunpack.c.l.b16 %v449
    %v533 = vunpack.c.h.b16 %v449
    %v534 = vunpack.c.l.b16 %v450
    %v535 = vunpack.c.h.b16 %v450
    %v536 = vunpack.c.l.b16 %v451
    %v537 = vunpack.c.h.b16 %v451
    %v538 = vunpack.c.l.b16 %v452
    %v539 = vunpack.c.h.b16 %v452
    %v540 = vunpack.c.l.b16 %v453
    %v541 = vunpack.c.h.b16 %v453
    %v542 = vunpack.c.l.b16 %v454
    %v543 = vunpack.c.h.b16 %v454
    %v544 = vunpack.c.l.b16 %v455
    %v545 = vunpack.c.h.b16 %v455
    %v546 = vunpack.c.l.b16 %v456
    %v547 = vunpack.c.h.b16 %v456
    %v548 = vunpack.c.l.b16 %v457
    %v549 = vunpack.c.h.b16 %v457
    %v550 = vunpack.c.l.b16 %v458
    %v551 = vunpack.c.h.b16 %v458
    %v552 = vunpack.c.l.b16 %v459
    %v553 = vunpack.c.h.b16 %v459
    %v554 = vunpack.c.l.b16 %v460
    %v555 = vunpack.c.h.b16 %v460
    %v556 = vunpack.c.l.b16 %v461
    %v557 = vunpack.c.h.b16 %v461
    %v558 = vpack.c.b16 %v496, %v494
    %v559 = vpack.c.b16 %v497, %v495
    %v560 = vpack.c.b16 %v500, %v498
    %v561 = vpack.c.b16 %v501, %v499
    %v562 = vpack.c.b16 %v504, %v502
    %v563 = vpack.c.b16 %v505, %v503
    %v564 = vpack.c.b16 %v508, %v506
    %v565 = vpack.c.b16 %v509, %v507
    %v566 = vpack.c.b16 %v512, %v510
    %v567 = vpack.c.b16 %v513, %v511
    %v568 = vpack.c.b16 %v516, %v514
    %v569 = vpack.c.b16 %v517, %v515
    %v570 = vpack.c.b16 %v520, %v518
    %v571 = vpack.c.b16 %v521, %v519
    %v572 = vpack.c.b16 %v524, %v522
    %v573 = vpack.c.b16 %v525, %v523
    %v574 = vpack.c.b16 %v528, %v526
    %v575 = vpack.c.b16 %v529, %v527
    %v576 = vpack.c.b16 %v532, %v530
    %v577 = vpack.c.b16 %v533, %v531
    %v578 = vpack.c.b16 %v536, %v534
    %v579 = vpack.c.b16 %v537, %v535
    %v580 = vpack.c.b16 %v540, %v538
    %v581 = vpack.c.b16 %v541, %v539
    %v582 = vpack.c.b16 %v544, %v542
    %v583 = vpack.c.b16 %v545, %v543
    %v584 = vpack.c.b16 %v548, %v546
    %v585 = vpack.c.b16 %v549, %v547
    %v586 = vpack.c.b16 %v552, %v550
    %v587 = vpack.c.b16 %v553, %v551
    %v588 = vpack.c.b16 %v556, %v554
    %v589 = vpack.c.b16 %v557, %v555
    %622 = vmatpush.bf16.msra.mxu0 %v572
    %623 = vmatpush.bf16.msra.mxu0 %v570
    %624 = vmatpush.bf16.msra.mxu0 %v568
    %625 = vmatpush.bf16.msra.mxu0 %v566
    %626 = vmatpush.bf16.msra.mxu0 %v564
    %627 = vmatpush.bf16.msra.mxu0 %v562
    %628 = vmatpush.bf16.msra.mxu0 %v560
    %629 = vmatpush.bf16.msra.mxu0 %v558
    %630 = vmatmul.bf16.gmra.mxu0 %v428
    %v631 = vpop.f32.mrf.mxu0
    %v632 = vadd.f32 0.0, %v631
    %v633 = vpop.f32.mrf.mxu0
    %v634 = vadd.f32 0.0, %v633
    %635 = vdwg.mxu0
    %636 = vmatpush.bf16.msra.mxu0 %v588
    %637 = vmatpush.bf16.msra.mxu0 %v586
    %638 = vmatpush.bf16.msra.mxu0 %v584
    %639 = vmatpush.bf16.msra.mxu0 %v582
    %640 = vmatpush.bf16.msra.mxu0 %v580
    %641 = vmatpush.bf16.msra.mxu0 %v578
    %642 = vmatpush.bf16.msra.mxu0 %v576
    %643 = vmatpush.bf16.msra.mxu0 %v574
    %644 = vmatmul.bf16.gmra.mxu0 %v429
    %v645 = vpop.f32.mrf.mxu0
    %v646 = vadd.f32 %v632, %v645
    %v647 = vpop.f32.mrf.mxu0
    %v648 = vadd.f32 %v634, %v647
    %649 = vdwg.mxu0
    %650 = vmatpush.bf16.msra.mxu0 %v573
    %651 = vmatpush.bf16.msra.mxu0 %v571
    %652 = vmatpush.bf16.msra.mxu0 %v569
    %653 = vmatpush.bf16.msra.mxu0 %v567
    %654 = vmatpush.bf16.msra.mxu0 %v565
    %655 = vmatpush.bf16.msra.mxu0 %v563
    %656 = vmatpush.bf16.msra.mxu0 %v561
    %657 = vmatpush.bf16.msra.mxu0 %v559
    %658 = vmatmul.bf16.gmra.mxu0 %v428
    %v659 = vpop.f32.mrf.mxu0
    %v660 = vadd.f32 0.0, %v659
    %v661 = vpop.f32.mrf.mxu0
    %v662 = vadd.f32 0.0, %v661
    %663 = vdwg.mxu0
    %664 = vmatpush.bf16.msra.mxu0 %v589
    %665 = vmatpush.bf16.msra.mxu0 %v587
    %666 = vmatpush.bf16.msra.mxu0 %v585
    %667 = vmatpush.bf16.msra.mxu0 %v583
    %668 = vmatpush.bf16.msra.mxu0 %v581
    %669 = vmatpush.bf16.msra.mxu0 %v579
    %670 = vmatpush.bf16.msra.mxu0 %v577
    %671 = vmatpush.bf16.msra.mxu0 %v575
    %672 = vmatmul.bf16.gmra.mxu0 %v429
    %v673 = vpop.f32.mrf.mxu0
    %v674 = vadd.f32 %v660, %v673
    %v675 = vpop.f32.mrf.mxu0
    %v676 = vadd.f32 %v662, %v675
    %677 = vdwg.mxu0
    %v678 = vpack.c.bf16 %v674, %v646
    %v679 = vpack.c.bf16 %v676, %v648
    %v680 = vld [vmem:[%s6] sm:$0x3]
    %682 = vst [vmem:[#allocation1] ss:$9 sm:$0xff] %v680
    %v683 = vld [vmem:[#allocation1] sm:$0xff]
    %v684 = vld [vmem:[#allocation1 + $0x9] sm:$0xff]
    %v685 = vpack.i.b16 %v683, %v683
    %v687 = vperm.slane %v685, 0
    %v688 = vpack.i.b16 %v684, %v684
    %v690 = vperm.slane %v688, 0
    %v691 = vunpack.c.l.bf16 %v678
    %v692 = vunpack.c.h.bf16 %v678
    %v693 = vunpack.c.l.bf16 %v679
    %v694 = vunpack.c.h.bf16 %v679
    %v695 = vunpack.c.l.bf16 %v687
    %v696 = vunpack.c.l.bf16 %v690
    %v697 = vadd.f32 %v691, %v695
    %v698 = vadd.f32 %v692, %v696
    %v699 = vadd.f32 %v693, %v695
    %v700 = vadd.f32 %v694, %v696
    %v701 = vpack.c.bf16 %v698, %v697
    %v702 = vpack.c.bf16 %v700, %v699
    %v703 = vunpack.c.l.bf16 %v701
    %v704 = vunpack.c.h.bf16 %v701
    %v705 = vunpack.c.l.bf16 %v702
    %v706 = vunpack.c.h.bf16 %v702
    %v707 = vmax.f32 %v703, 0.0
    %v708 = vmax.f32 %v704, 0.0
    %v709 = vmax.f32 %v705, 0.0
    %v710 = vmax.f32 %v706, 0.0
    %v711 = vpack.c.bf16 %v709, %v707
    %v712 = vpack.c.bf16 %v710, %v708
    %v713 = vld [vmem:[%s7] sm:$0xf]
    %v714 = vld [vmem:[%s7 + $0x4] sm:$0xf]
    %v715 = vld [vmem:[%s7 + $0x8] sm:$0xf]
    %v716 = vld [vmem:[%s7 + $0xc] sm:$0xf]
    %v717 = vld [vmem:[%s7 + $0x10] sm:$0xf]
    %v718 = vld [vmem:[%s7 + $0x14] sm:$0xf]
    %v719 = vld [vmem:[%s7 + $0x18] sm:$0xf]
    %v720 = vld [vmem:[%s7 + $0x1c] sm:$0xf]
    %v721 = vld [vmem:[%s7 + $0x20] sm:$0xf]
    %v722 = vld [vmem:[%s7 + $0x24] sm:$0xf]
    %v723 = vld [vmem:[%s7 + $0x28] sm:$0xf]
    %v724 = vld [vmem:[%s7 + $0x2c] sm:$0xf]
    %v725 = vld [vmem:[%s7 + $0x30] sm:$0xf]
    %v726 = vld [vmem:[%s7 + $0x34] sm:$0xf]
    %v727 = vld [vmem:[%s7 + $0x38] sm:$0xf]
    %v728 = vld [vmem:[%s7 + $0x3c] sm:$0xf]
    %v729 = vld [vmem:[%s7 + $0x40] sm:$0xf]
    %v730 = vld [vmem:[%s7 + $0x44] sm:$0xf]
    %v731 = vld [vmem:[%s7 + $0x48] sm:$0xf]
    %v732 = vld [vmem:[%s7 + $0x4c] sm:$0xf]
    %v733 = vld [vmem:[%s7 + $0x50] sm:$0xf]
    %v734 = vld [vmem:[%s7 + $0x54] sm:$0xf]
    %v735 = vld [vmem:[%s7 + $0x58] sm:$0xf]
    %v736 = vld [vmem:[%s7 + $0x5c] sm:$0xf]
    %v737 = vld [vmem:[%s7 + $0x60] sm:$0xf]
    %v738 = vld [vmem:[%s7 + $0x64] sm:$0xf]
    %v739 = vld [vmem:[%s7 + $0x68] sm:$0xf]
    %v740 = vld [vmem:[%s7 + $0x6c] sm:$0xf]
    %v741 = vld [vmem:[%s7 + $0x70] sm:$0xf]
    %v742 = vld [vmem:[%s7 + $0x74] sm:$0xf]
    %v743 = vld [vmem:[%s7 + $0x78] sm:$0xf]
    %v744 = vld [vmem:[%s7 + $0x7c] sm:$0xf]
    %v777 = vunpack.c.l.b16 %v713
    %v778 = vunpack.c.l.b16 %v714
    %v779 = vunpack.c.l.b16 %v715
    %v780 = vunpack.c.l.b16 %v716
    %v781 = vunpack.c.l.b16 %v717
    %v782 = vunpack.c.l.b16 %v718
    %v783 = vunpack.c.l.b16 %v719
    %v784 = vunpack.c.l.b16 %v720
    %v785 = vunpack.c.l.b16 %v721
    %v786 = vunpack.c.l.b16 %v722
    %v787 = vunpack.c.l.b16 %v723
    %v788 = vunpack.c.l.b16 %v724
    %v789 = vunpack.c.l.b16 %v725
    %v790 = vunpack.c.l.b16 %v726
    %v791 = vunpack.c.l.b16 %v727
    %v792 = vunpack.c.l.b16 %v728
    %v793 = vunpack.c.l.b16 %v729
    %v794 = vunpack.c.l.b16 %v730
    %v795 = vunpack.c.l.b16 %v731
    %v796 = vunpack.c.l.b16 %v732
    %v797 = vunpack.c.l.b16 %v733
    %v798 = vunpack.c.l.b16 %v734
    %v799 = vunpack.c.l.b16 %v735
    %v800 = vunpack.c.l.b16 %v736
    %v801 = vunpack.c.l.b16 %v737
    %v802 = vunpack.c.l.b16 %v738
    %v803 = vunpack.c.l.b16 %v739
    %v804 = vunpack.c.l.b16 %v740
    %v805 = vunpack.c.l.b16 %v741
    %v806 = vunpack.c.l.b16 %v742
    %v807 = vunpack.c.l.b16 %v743
    %v808 = vunpack.c.l.b16 %v744
    %v809 = vpack.c.b16 %v778, %v777
    %v810 = vpack.c.b16 %v780, %v779
    %v811 = vpack.c.b16 %v782, %v781
    %v812 = vpack.c.b16 %v784, %v783
    %v813 = vpack.c.b16 %v786, %v785
    %v814 = vpack.c.b16 %v788, %v787
    %v815 = vpack.c.b16 %v790, %v789
    %v816 = vpack.c.b16 %v792, %v791
    %v817 = vpack.c.b16 %v794, %v793
    %v818 = vpack.c.b16 %v796, %v795
    %v819 = vpack.c.b16 %v798, %v797
    %v820 = vpack.c.b16 %v800, %v799
    %v821 = vpack.c.b16 %v802, %v801
    %v822 = vpack.c.b16 %v804, %v803
    %v823 = vpack.c.b16 %v806, %v805
    %v824 = vpack.c.b16 %v808, %v807
    %841 = vmatpush.bf16.msra.mxu0 %v816
    %842 = vmatpush.bf16.msra.mxu0 %v815
    %843 = vmatpush.bf16.msra.mxu0 %v814
    %844 = vmatpush.bf16.msra.mxu0 %v813
    %845 = vmatpush.bf16.msra.mxu0 %v812
    %846 = vmatpush.bf16.msra.mxu0 %v811
    %847 = vmatpush.bf16.msra.mxu0 %v810
    %848 = vmatpush.bf16.msra.mxu0 %v809
    %849 = vmatmul.bf16.gmra.mxu0 %v711
    %v850 = vpop.f32.mrf.mxu0
    %v851 = vadd.f32 0.0, %v850
    %v852 = vpop.f32.mrf.mxu0
    %v853 = vadd.f32 0.0, %v852
    %854 = vdwg.mxu0
    %855 = vmatpush.bf16.msra.mxu0 %v824
    %856 = vmatpush.bf16.msra.mxu0 %v823
    %857 = vmatpush.bf16.msra.mxu0 %v822
    %858 = vmatpush.bf16.msra.mxu0 %v821
    %859 = vmatpush.bf16.msra.mxu0 %v820
    %860 = vmatpush.bf16.msra.mxu0 %v819
    %861 = vmatpush.bf16.msra.mxu0 %v818
    %862 = vmatpush.bf16.msra.mxu0 %v817
    %863 = vmatmul.bf16.gmra.mxu0 %v712
    %v864 = vpop.f32.mrf.mxu0
    %v865 = vadd.f32 %v851, %v864
    %v866 = vpop.f32.mrf.mxu0
    %v867 = vadd.f32 %v853, %v866
    %868 = vdwg.mxu0
    %v869 = vpack.c.bf16 %v865, %v865
    %v870 = vpack.c.bf16 %v867, %v867
    %v871 = vld [vmem:[%s8] sm:$0x1]
    %v873 = vpack.i.b16 %v871, %v871
    %v875 = vperm.slane %v873, 0
    %v876 = vunpack.c.l.bf16 %v869
    %v877 = vunpack.c.l.bf16 %v870
    %v878 = vunpack.c.l.bf16 %v875
    %v879 = vadd.f32 %v876, %v878
    %v880 = vadd.f32 %v877, %v878
    %v881 = vpack.c.bf16 %v879, %v879
    %v882 = vpack.c.bf16 %v880, %v880
    %883 = vst [vmem:[%s9] sm:$0xf] %v881
    %884 = vst [vmem:[%s9 + $0x4] sm:$0xf] %v882
    // Predicated region
    $region42: #{dqn_forward.1} parent=1 // pred_check
      _
    $region43: #{dqn_forward.1} parent=1 // pred_check_branch
      %886 = sbr.rel (0) target = $region45
    $region44: #{dqn_forward.1} parent=1 // pred_region
      _
    $region45: #{dqn_forward.1} parent=1 // pred_fallthru
      _
    // Predicated region
    $region46: #{dqn_forward.1} parent=1 // pred_check
      _
    $region47: #{dqn_forward.1} parent=1 // pred_check_branch
      %888 = sbr.rel (0) target = $region49
    $region48: #{dqn_forward.1} parent=1 // pred_region
      _
    $region49: #{dqn_forward.1} parent=1 // pred_fallthru
      _
    %889 = vsyncpa [#allocation3], 1

</llo_original>
